<compile_context>
chip_gen: v7x
topology: tpu7x:2x2x1
jax: 0.10.0
libtpu: 0.0.40
codegen_flags: <defaults>
</compile_context>

<pallas_src>
import math

import jax
import jax.numpy as jnp
from jax.experimental import pallas as pl
from jax.experimental.pallas import tpu as pltpu


def _timestep_embedder_kernel(t_ref, freqs_ref, w1c_ref, w1s_ref, b1_ref,
                              w2_ref, b2_ref, out_ref):
    # Sinusoidal embedding for this tile of timesteps: args[i, j] = t[i]*f[j]
    args = t_ref[...] * freqs_ref[...]                        # (TN, half) f32
    cos_e = jnp.cos(args).astype(jnp.bfloat16)
    sin_e = jnp.sin(args).astype(jnp.bfloat16)

    # First Linear, concat-free: [cos|sin] @ [w1_cos; w1_sin] == two matmuls
    # accumulated in f32 on the MXU.
    h = jnp.dot(cos_e, w1c_ref[...], preferred_element_type=jnp.float32)
    h = h + jnp.dot(sin_e, w1s_ref[...], preferred_element_type=jnp.float32)
    h = h + b1_ref[...]                                       # (TN, Hp) f32

    # SiLU in f32 (VPU/EUP; keep f32 for v5e which has no bf16 vector path).
    h = h * jax.nn.sigmoid(h)

    # Second Linear (bf16 operands, f32 accumulation).
    o = jnp.dot(h.astype(jnp.bfloat16), w2_ref[...],
                preferred_element_type=jnp.float32)
    out_ref[...] = o + b2_ref[...]                            # (TN, Hp) f32


def timestep_embedder(t, w1, b1, w2, b2, frequency_embedding_size=256,
                      max_period=10000, tile_n=256):
    """t: (N,) f32 timesteps.  w1: (F, H), b1: (H,), w2: (H, H), b2: (H,).

    Weights follow the x @ W + b layout (PyTorch's weight.T).  Returns (N, H)
    f32, matching TimestepEmbedder.forward.
    """
    # TODO(synk): odd frequency_embedding_size (PyTorch appends a zero column)
    # is not handled; F is assumed even, as in the default config.
    n = t.shape[0]
    half = frequency_embedding_size // 2
    hidden = w2.shape[1]

    # Pad hidden to a lane-dense multiple of 128 and batch to a multiple of
    # the (8-aligned) row tile.  Zero padding is exact: padded h columns are
    # SiLU(0) = 0 and padded output columns are 0; they are sliced off below.
    h_pad = ((hidden + 127) // 128) * 128
    n8 = ((n + 7) // 8) * 8
    tn = min(tile_n, n8)
    n_pad = ((n8 + tn - 1) // tn) * tn

    # Frequency table (tiny wrapper-side glue).
    freqs = jnp.exp(
        -math.log(max_period)
        * jnp.arange(half, dtype=jnp.float32) / half)         # (half,)
    freqs2d = freqs.reshape(1, half)

    t_pad = jnp.zeros((n_pad, 1), jnp.float32).at[:n, 0].set(
        t.astype(jnp.float32))

    # Split w1 into cos / sin halves, pad hidden, store weights in bf16.
    w1c = jnp.zeros((half, h_pad), jnp.bfloat16).at[:, :hidden].set(
        w1[:half].astype(jnp.bfloat16))
    w1s = jnp.zeros((half, h_pad), jnp.bfloat16).at[:, :hidden].set(
        w1[half:].astype(jnp.bfloat16))
    w2p = jnp.zeros((h_pad, h_pad), jnp.bfloat16).at[:hidden, :hidden].set(
        w2.astype(jnp.bfloat16))
    b1p = jnp.zeros((1, h_pad), jnp.float32).at[0, :hidden].set(
        b1.astype(jnp.float32))
    b2p = jnp.zeros((1, h_pad), jnp.float32).at[0, :hidden].set(
        b2.astype(jnp.float32))

    # Weights / freqs / biases stay resident (constant block index); only the
    # timestep rows and the output tile move with the grid.
    resident = lambda shape: pl.BlockSpec(shape, lambda i: (0,) * len(shape))

    out = pl.pallas_call(
        _timestep_embedder_kernel,
        out_shape=jax.ShapeDtypeStruct((n_pad, h_pad), jnp.float32),
        grid_spec=pltpu.PrefetchScalarGridSpec(
            num_scalar_prefetch=0,
            grid=(n_pad // tn,),
            in_specs=[
                pl.BlockSpec((tn, 1), lambda i: (i, 0)),      # t rows
                resident((1, half)),                          # freqs
                resident((half, h_pad)),                      # w1 cos half
                resident((half, h_pad)),                      # w1 sin half
                resident((1, h_pad)),                         # b1
                resident((h_pad, h_pad)),                     # w2
                resident((1, h_pad)),                         # b2
            ],
            out_specs=pl.BlockSpec((tn, h_pad), lambda i: (i, 0)),
        ),
        compiler_params=pltpu.CompilerParams(
            # Batch axis is independent -> megacore-shardable on v7x.
            dimension_semantics=("parallel",)),
    )(t_pad, freqs2d, w1c, w1s, b1p, w2p, b2p)

    return out[:n, :hidden]


def reference(t, w1, b1, w2, b2, frequency_embedding_size=256,
              max_period=10000):
    half = frequency_embedding_size // 2
    freqs = jnp.exp(-math.log(max_period)
                    * jnp.arange(half, dtype=jnp.float32) / half)
    args = t.astype(jnp.float32)[:, None] * freqs[None, :]
    emb = jnp.concatenate([jnp.cos(args), jnp.sin(args)], axis=-1)
    h = emb @ w1 + b1
    h = h * jax.nn.sigmoid(h)
    return h @ w2 + b2


if __name__ == "__main__":
    hidden_size = 32
    freq_size = 256
    batch = 8

    key = jax.random.PRNGKey(0)
    k_t, k_w1, k_b1, k_w2, k_b2 = jax.random.split(key, 5)

    # Deterministic synthetic parameters (shapes from nn.Linear in __init__),
    # stored as x @ W + b (i.e. PyTorch weight.T).
    t = jax.random.uniform(k_t, (batch,), jnp.float32) * 1000.0
    w1 = jax.random.normal(k_w1, (freq_size, hidden_size), jnp.float32) * 0.02
    b1 = jax.random.normal(k_b1, (hidden_size,), jnp.float32) * 0.02
    w2 = jax.random.normal(k_w2, (hidden_size, hidden_size), jnp.float32) * 0.02
    b2 = jax.random.normal(k_b2, (hidden_size,), jnp.float32) * 0.02

    out = timestep_embedder(t, w1, b1, w2, b2, freq_size)
    out = jax.block_until_ready(out)

    ref = reference(t, w1, b1, w2, b2, freq_size)
    assert out.shape == (batch, hidden_size)
    # Tolerance reflects bf16 MXU operands with f32 accumulation.
    assert jnp.allclose(out, ref, atol=3e-3, rtol=3e-2), "mismatch vs reference"

    print("KERNEL_OK")
</pallas_src>

<mosaic_0001>
module attributes {stable_mosaic.version = 11 : i64} {
  func.func @_timestep_embedder_kernel(%arg0: i32, %arg1: memref<8x1xf32, #tpu.memory_space<vmem>>, %arg2: memref<1x128xf32, #tpu.memory_space<vmem>>, %arg3: memref<128x128xbf16, #tpu.memory_space<vmem>>, %arg4: memref<128x128xbf16, #tpu.memory_space<vmem>>, %arg5: memref<1x128xf32, #tpu.memory_space<vmem>>, %arg6: memref<128x128xbf16, #tpu.memory_space<vmem>>, %arg7: memref<1x128xf32, #tpu.memory_space<vmem>>, %arg8: memref<8x128xf32, #tpu.memory_space<vmem>>) attributes {dimension_semantics = [#tpu.dimension_semantics<parallel>], iteration_bounds = array<i64: 1>, scalar_prefetch = 0 : i64, scratch_operands = 0 : i64, tpu.core_type = #tpu.core_type<tc>, window_params = [{transform_indices = @transform_0, window_bounds = array<i64: 8, 1>}, {pipeline_mode = #tpu.pipeline_mode<synchronous>, transform_indices = @transform_1, window_bounds = array<i64: 1, 128>}, {pipeline_mode = #tpu.pipeline_mode<synchronous>, transform_indices = @transform_2, window_bounds = array<i64: 128, 128>}, {pipeline_mode = #tpu.pipeline_mode<synchronous>, transform_indices = @transform_3, window_bounds = array<i64: 128, 128>}, {pipeline_mode = #tpu.pipeline_mode<synchronous>, transform_indices = @transform_4, window_bounds = array<i64: 1, 128>}, {pipeline_mode = #tpu.pipeline_mode<synchronous>, transform_indices = @transform_5, window_bounds = array<i64: 128, 128>}, {pipeline_mode = #tpu.pipeline_mode<synchronous>, transform_indices = @transform_6, window_bounds = array<i64: 1, 128>}, {transform_indices = @transform_7, window_bounds = array<i64: 8, 128>}]} {
    %c0 = arith.constant 0 : index
    %c0_0 = arith.constant 0 : index
    %0 = vector.load %arg1[%c0, %c0_0] : memref<8x1xf32, #tpu.memory_space<vmem>>, vector<8x1xf32>
    %c0_1 = arith.constant 0 : index
    %c0_2 = arith.constant 0 : index
    %1 = vector.load %arg2[%c0_1, %c0_2] : memref<1x128xf32, #tpu.memory_space<vmem>>, vector<1x128xf32>
    %2 = vector.broadcast %0 : vector<8x1xf32> to vector<8x128xf32>
    %3 = vector.broadcast %1 : vector<1x128xf32> to vector<8x128xf32>
    %4 = arith.mulf %2, %3 : vector<8x128xf32>
    %5 = math.cos %4 : vector<8x128xf32>
    %6 = arith.truncf %5 : vector<8x128xf32> to vector<8x128xbf16>
    %7 = math.sin %4 : vector<8x128xf32>
    %8 = arith.truncf %7 : vector<8x128xf32> to vector<8x128xbf16>
    %c0_3 = arith.constant 0 : index
    %c0_4 = arith.constant 0 : index
    %9 = vector.load %arg3[%c0_3, %c0_4] : memref<128x128xbf16, #tpu.memory_space<vmem>>, vector<128x128xbf16>
    %cst = arith.constant dense<0.000000e+00> : vector<8x128xf32>
    %10 = tpu.matmul %6, %9, %cst {dimension_numbers = #tpu.dot_dimension_numbers<[1], [0], [0], [1], [0, 0, 1, 1], [], []>} : vector<8x128xbf16>, vector<128x128xbf16>, vector<8x128xf32> -> vector<8x128xf32>
    %c0_5 = arith.constant 0 : index
    %c0_6 = arith.constant 0 : index
    %11 = vector.load %arg4[%c0_5, %c0_6] : memref<128x128xbf16, #tpu.memory_space<vmem>>, vector<128x128xbf16>
    %cst_7 = arith.constant dense<0.000000e+00> : vector<8x128xf32>
    %12 = tpu.matmul %8, %11, %cst_7 {dimension_numbers = #tpu.dot_dimension_numbers<[1], [0], [0], [1], [0, 0, 1, 1], [], []>} : vector<8x128xbf16>, vector<128x128xbf16>, vector<8x128xf32> -> vector<8x128xf32>
    %13 = arith.addf %10, %12 : vector<8x128xf32>
    %c0_8 = arith.constant 0 : index
    %c0_9 = arith.constant 0 : index
    %14 = vector.load %arg5[%c0_8, %c0_9] : memref<1x128xf32, #tpu.memory_space<vmem>>, vector<1x128xf32>
    %15 = vector.broadcast %14 : vector<1x128xf32> to vector<8x128xf32>
    %16 = arith.addf %13, %15 : vector<8x128xf32>
    %17 = arith.negf %16 : vector<8x128xf32>
    %18 = math.exp %17 : vector<8x128xf32>
    %cst_10 = arith.constant 1.000000e+00 : f32
    %19 = vector.broadcast %cst_10 : f32 to vector<8x128xf32>
    %20 = arith.addf %19, %18 : vector<8x128xf32>
    %21 = arith.divf %19, %20 : vector<8x128xf32>
    %22 = arith.mulf %16, %21 : vector<8x128xf32>
    %23 = arith.truncf %22 : vector<8x128xf32> to vector<8x128xbf16>
    %c0_11 = arith.constant 0 : index
    %c0_12 = arith.constant 0 : index
    %24 = vector.load %arg6[%c0_11, %c0_12] : memref<128x128xbf16, #tpu.memory_space<vmem>>, vector<128x128xbf16>
    %cst_13 = arith.constant dense<0.000000e+00> : vector<8x128xf32>
    %25 = tpu.matmul %23, %24, %cst_13 {dimension_numbers = #tpu.dot_dimension_numbers<[1], [0], [0], [1], [0, 0, 1, 1], [], []>} : vector<8x128xbf16>, vector<128x128xbf16>, vector<8x128xf32> -> vector<8x128xf32>
    %c0_14 = arith.constant 0 : index
    %c0_15 = arith.constant 0 : index
    %26 = vector.load %arg7[%c0_14, %c0_15] : memref<1x128xf32, #tpu.memory_space<vmem>>, vector<1x128xf32>
    %27 = vector.broadcast %26 : vector<1x128xf32> to vector<8x128xf32>
    %28 = arith.addf %25, %27 : vector<8x128xf32>
    %c0_16 = arith.constant 0 : index
    %c0_17 = arith.constant 0 : index
    %29 = vector.load %arg8[%c0_16, %c0_17] : memref<8x128xf32, #tpu.memory_space<vmem>>, vector<8x128xf32>
    tpu.vector_store %arg8[%c0_16, %c0_17], %28 {strides = array<i32>} : memref<8x128xf32, #tpu.memory_space<vmem>>, vector<8x128xf32>,
    return
  }
  func.func @transform_0(%arg0: i32) -> (i32, i32) {
    %c0_i32 = arith.constant 0 : i32
    %c0_i32_0 = arith.constant 0 : i32
    return %arg0, %c0_i32 : i32, i32
  }
  func.func @transform_1(%arg0: i32) -> (i32, i32) {
    %c0_i32 = arith.constant 0 : i32
    %c0_i32_0 = arith.constant 0 : i32
    %c0_i32_1 = arith.constant 0 : i32
    return %c0_i32, %c0_i32_0 : i32, i32
  }
  func.func @transform_2(%arg0: i32) -> (i32, i32) {
    %c0_i32 = arith.constant 0 : i32
    %c0_i32_0 = arith.constant 0 : i32
    %c0_i32_1 = arith.constant 0 : i32
    return %c0_i32, %c0_i32_0 : i32, i32
  }
  func.func @transform_3(%arg0: i32) -> (i32, i32) {
    %c0_i32 = arith.constant 0 : i32
    %c0_i32_0 = arith.constant 0 : i32
    %c0_i32_1 = arith.constant 0 : i32
    return %c0_i32, %c0_i32_0 : i32, i32
  }
  func.func @transform_4(%arg0: i32) -> (i32, i32) {
    %c0_i32 = arith.constant 0 : i32
    %c0_i32_0 = arith.constant 0 : i32
    %c0_i32_1 = arith.constant 0 : i32
    return %c0_i32, %c0_i32_0 : i32, i32
  }
  func.func @transform_5(%arg0: i32) -> (i32, i32) {
    %c0_i32 = arith.constant 0 : i32
    %c0_i32_0 = arith.constant 0 : i32
    %c0_i32_1 = arith.constant 0 : i32
    return %c0_i32, %c0_i32_0 : i32, i32
  }
  func.func @transform_6(%arg0: i32) -> (i32, i32) {
    %c0_i32 = arith.constant 0 : i32
    %c0_i32_0 = arith.constant 0 : i32
    %c0_i32_1 = arith.constant 0 : i32
    return %c0_i32, %c0_i32_0 : i32, i32
  }
  func.func @transform_7(%arg0: i32) -> (i32, i32) {
    %c0_i32 = arith.constant 0 : i32
    %c0_i32_0 = arith.constant 0 : i32
    return %arg0, %c0_i32 : i32, i32
  }
}

</mosaic_0001>

<llo_original>
// kernel: tpu_custom_call.1
$region0: #{tpu_custom_call.1}
  #allocation0 [shape = 'u32[]', space=smem, size = 0x4, offset = 0x4, fixed_abs, tag = 'smem constant byte address 0x4 - core index']
  #allocation1 [shape = 'u32[144,128]{1,0:T(1,128)}', space=vmem, size = 0x12000, scoped, tag = 'internal scratch']
  %s0 = inlined_call_operand.vmem [shape: f32[8,1], index: 0, kind: input, shape index: {}]
  %s1 = inlined_call_operand.vmem [shape: f32[1,128], index: 1, kind: input, shape index: {}]
  %s2 = inlined_call_operand.hbm [shape: bf16[128,128], index: 2, kind: input, shape index: {}]
  %s3 = inlined_call_operand.hbm [shape: bf16[128,128], index: 3, kind: input, shape index: {}]
  %s4 = inlined_call_operand.vmem [shape: f32[1,128], index: 4, kind: input, shape index: {}]
  %s5 = inlined_call_operand.hbm [shape: bf16[128,128], index: 5, kind: input, shape index: {}]
  %s6 = inlined_call_operand.vmem [shape: f32[1,128], index: 6, kind: input, shape index: {}]
  %s7 = inlined_call_operand.hbm [shape: f32[8,128], index: 7, kind: output, shape index: {}]
  %s8 = sld [smem:[#allocation0]]
  $region50: #{tpu_custom_call.1} parent=0
    _
  %s10 = ssub.s32 1, %s8
  %s11 = scalar_select 0, %s10, %s8
  $region1: #{tpu_custom_call.1} parent=0
    #allocation2 [shape = 'u8[32768]{0}', space=vmem, size = 0x8000, scoped, tag = 'input window, operand 2, single buffered']
    #allocation3 [shape = 's32[1]{0}', space=sflag, size = 0x4, scoped, tag = 'scoped memory for tpu_custom_call.1']
    #allocation4 [shape = 's32[1]{0}', space=sflag, size = 0x4, scoped, tag = 'scoped memory for tpu_custom_call.1']
    #allocation5 [shape = 'u8[32768]{0}', space=vmem, size = 0x8000, scoped, tag = 'input window, operand 3, single buffered']
    #allocation6 [shape = 's32[1]{0}', space=sflag, size = 0x4, scoped, tag = 'scoped memory for tpu_custom_call.1']
    #allocation7 [shape = 'u8[32768]{0}', space=vmem, size = 0x8000, scoped, tag = 'input window, operand 5, single buffered']
    #allocation8 [shape = 'u8[4096]{0}', space=vmem, size = 0x1000, scoped, tag = 'output window, operand 0, single buffered']
    %12 = vsyncpa [#allocation3], 0
    %13 = vsyncpa [#allocation6], 0
    %14 = vsyncpa [#allocation4], 0
    // Predicated region
    $region2: #{tpu_custom_call.1} parent=1 // pred_check
      _
    $region3: #{tpu_custom_call.1} parent=1 // pred_check_branch
      %16 = sbr.rel (0) target = $region5
    $region4: #{tpu_custom_call.1} parent=1 // pred_region
      _
    $region5: #{tpu_custom_call.1} parent=1 // pred_fallthru
      _
    // Predicated region
    $region6: #{tpu_custom_call.1} parent=1 // pred_check
      _
    $region7: #{tpu_custom_call.1} parent=1 // pred_check_branch
      %18 = sbr.rel (0) target = $region9
    $region8: #{tpu_custom_call.1} parent=1 // pred_region
      _
    $region9: #{tpu_custom_call.1} parent=1 // pred_fallthru
      _
    // Predicated region
    $region10: #{tpu_custom_call.1} parent=1 // pred_check
      _
    $region11: #{tpu_custom_call.1} parent=1 // pred_check_branch
      %20 = sbr.rel (0) target = $region13
    $region12: #{tpu_custom_call.1} parent=1 // pred_region
      %s22 = ssub.s32 1024, 1024
      %23 = vsyncadd [#allocation3], %s22
      %s24 = sshll.u32 [#allocation2], 4
      %s25 = int_to_ptr.vmem [resolvable:$true] %s24
      %30 = dma.hbm_to_vmem [thread:$0]  %s2, 1024, %s25, [#allocation3], 64, 64, 4
    $region13: #{tpu_custom_call.1} parent=1 // pred_fallthru
      _
    // Predicated region
    $region14: #{tpu_custom_call.1} parent=1 // pred_check
      _
    $region15: #{tpu_custom_call.1} parent=1 // pred_check_branch
      %32 = sbr.rel (0) target = $region17
    $region16: #{tpu_custom_call.1} parent=1 // pred_region
      %s34 = ssub.s32 1024, 1024
      %35 = vsyncadd [#allocation6], %s34
      %s36 = sshll.u32 [#allocation5], 4
      %s37 = int_to_ptr.vmem [resolvable:$true] %s36
      %42 = dma.hbm_to_vmem [thread:$0]  %s3, 1024, %s37, [#allocation6], 64, 64, 4
    $region17: #{tpu_custom_call.1} parent=1 // pred_fallthru
      _
    // Predicated region
    $region18: #{tpu_custom_call.1} parent=1 // pred_check
      _
    $region19: #{tpu_custom_call.1} parent=1 // pred_check_branch
      %44 = sbr.rel (0) target = $region21
    $region20: #{tpu_custom_call.1} parent=1 // pred_region
      _
    $region21: #{tpu_custom_call.1} parent=1 // pred_fallthru
      _
    // Predicated region
    $region22: #{tpu_custom_call.1} parent=1 // pred_check
      _
    $region23: #{tpu_custom_call.1} parent=1 // pred_check_branch
      %46 = sbr.rel (0) target = $region25
    $region24: #{tpu_custom_call.1} parent=1 // pred_region
      %s48 = ssub.s32 1024, 1024
      %49 = vsyncadd [#allocation6], %s48
      %s50 = sshll.u32 [#allocation7], 4
      %s51 = int_to_ptr.vmem [resolvable:$true] %s50
      %56 = dma.hbm_to_vmem [thread:$0]  %s5, 1024, %s51, [#allocation6], 64, 64, 4
    $region25: #{tpu_custom_call.1} parent=1 // pred_fallthru
      _
    // Predicated region
    $region26: #{tpu_custom_call.1} parent=1 // pred_check
      _
    $region27: #{tpu_custom_call.1} parent=1 // pred_check_branch
      %58 = sbr.rel (0) target = $region29
    $region28: #{tpu_custom_call.1} parent=1 // pred_region
      _
    $region29: #{tpu_custom_call.1} parent=1 // pred_fallthru
      _
    // Predicated region
    $region30: #{tpu_custom_call.1} parent=1 // pred_check
      _
    $region31: #{tpu_custom_call.1} parent=1 // pred_check_branch
      %60 = sbr.rel (0) target = $region33
    $region32: #{tpu_custom_call.1} parent=1 // pred_region
      %61 = dma.done [#allocation3], 1024
    $region33: #{tpu_custom_call.1} parent=1 // pred_fallthru
      _
    // Predicated region
    $region34: #{tpu_custom_call.1} parent=1 // pred_check
      _
    $region35: #{tpu_custom_call.1} parent=1 // pred_check_branch
      %63 = sbr.rel (0) target = $region37
    $region36: #{tpu_custom_call.1} parent=1 // pred_region
      %64 = dma.done [#allocation6], 1024
    $region37: #{tpu_custom_call.1} parent=1 // pred_fallthru
      _
    // Predicated region
    $region38: #{tpu_custom_call.1} parent=1 // pred_check
      _
    $region39: #{tpu_custom_call.1} parent=1 // pred_check_branch
      %66 = sbr.rel (0) target = $region41
    $region40: #{tpu_custom_call.1} parent=1 // pred_region
      %67 = dma.done [#allocation6], 1024
    $region41: #{tpu_custom_call.1} parent=1 // pred_fallthru
      _
    %v69 = vld [vmem:[%s0] sm:$0xff]
    %v70 = vld [vmem:[%s1] sm:$0x1]
    %72 = vset.pattern.permute.xlu0 0
    %73 = vperm.xlu0 %72, %v69
    %v74 = vpop.permute.xlu0 %73
    %v77 = vlaneseq
    %v78 = vshrl.u32 %v77, 7
    %v79 = vsub.s32 0, %v78
    %v80 = vrot.slane %v70, %v79
    %v82 = vmul.f32 %v74, %v80
    %v83 = vand.u32 2147483647, %v82
    %vm84 = vcmp.le.f32.partialorder %v83, 0.7853982
    %vm85 = vcmp.lt.s32.totalorder %v82, 0
    %v86 = vand.u32 %v82, 2139095040
    %v87 = vshrl.u32 %v86, 23
    %v88 = vsub.s32 %v87, 127
    %v89 = vand.u32 2147483647, %v82
    %v90 = vand.u32 %v89, 8388607
    %v91 = vor.u32 %v90, 8388608
    %v92 = vsub.s32 0, %v91
    %v93 = vadd.s32 %v88, 1
    %vm94 = vcmp.gt.s32.totalorder %v93, 0
    %v95 = vsel %vm94, %v93, 0
    %v96 = vshrl.u32 %v95, 5
    %v97 = vand.u32 %v95, 31
    %v98 = vsub.s32 32, %v97
    %v99 = vshrl.u32 683565275, %v98
    %v100 = vshll.u32 683565275, %v97
    %v101 = vshrl.u32 2475754826, %v98
    %v102 = vor.u32 %v100, %v101
    %v103 = vshll.u32 2475754826, %v97
    %v104 = vshrl.u32 2131351028, %v98
    %v105 = vor.u32 %v103, %v104
    %v106 = vshll.u32 2131351028, %v97
    %v107 = vshrl.u32 2102212464, %v98
    %v108 = vor.u32 %v106, %v107
    %v109 = vshll.u32 2102212464, %v97
    %v110 = vshrl.u32 920167782, %v98
    %v111 = vor.u32 %v109, %v110
    %v112 = vshll.u32 920167782, %v97
    %v113 = vshrl.u32 1326507024, %v98
    %v114 = vor.u32 %v112, %v113
    %vm115 = vcmp.lt.s32.totalorder %v96, 1
    %vm116 = vcmp.lt.s32.totalorder %v96, 2
    %vm117 = vcmp.lt.s32.totalorder %v96, 3
    %vm118 = vcmp.lt.s32.totalorder %v96, 4
    %v119 = vsel %vm115, %v99, %v102
    %v120 = vsel %vm118, %v108, 2102212464
    %v121 = vsel %vm117, %v105, %v120
    %v122 = vsel %vm116, %v119, %v121
    %v123 = vsel %vm115, %v102, %v105
    %v124 = vsel %vm118, %v111, 920167782
    %v125 = vsel %vm117, %v108, %v124
    %v126 = vsel %vm116, %v123, %v125
    %v127 = vsel %vm115, %v105, %v108
    %v128 = vsel %vm118, %v114, 1326507024
    %v129 = vsel %vm117, %v111, %v128
    %v130 = vsel %vm116, %v127, %v129
    %v131 = vshll.u32 %v91, 8
    %v132 = vmul.u32.u64.compose %v131, %v130
    %v133 = vextract.low.u32 %v132
    %v134 = vextract.high.u32 %v132
    %v135 = vmul.u32.u64.compose %v131, %v126
    %v136 = vextract.low.u32 %v135
    %v137 = vextract.high.u32 %v135
    %v138 = vmul.u32 %v131, %v122
    %v139 = vadd.s32 %v134, %v136
    %vm140 = vc.u32 %v134, %v136
    %v141 = vadd.s32 %v137, 1
    %v142 = vsel %vm140, %v141, %v137
    %v143 = vadd.s32 %v138, %v142
    %v144 = vadd.s32 %v143, 536870912
    %v145 = vshrl.u32 %v144, 30
    %v146 = vshll.u32 %v145, 30
    %v147 = vsub.s32 %v143, %v146
    %vm148 = vcmp.lt.s32.totalorder %v147, 0
    %v149 = vsub.s32 0, %v147
    %v150 = vsel %vm148, %v149, %v147
    %v151 = vclz %v150
    %v152 = vsub.s32 %v151, 2
    %vm153 = vcmp.gt.s32.totalorder 0, %v152
    %v154 = vsel %vm153, 0, %v152
    %v155 = vsub.s32 32, %v154
    %v156 = vshll.u32 %v147, %v154
    %v157 = vshrl.u32 %v139, %v155
    %v158 = vor.u32 %v156, %v157
    %v159 = vsub.s32 4294967266, %v154
    %v160 = vadd.s32 %v159, 127
    %v161 = vshll.u32 %v160, 23
    %v162 = vor.u32 4788187, %v161
    %v163 = vand.u32 2147483647, %v162
    %v165 = vcvt.s32.f32 %v158
    %v166 = vmul.f32 %v165, %v163
    %v167 = vxor.u32 %v166, 2147483648
    %v168 = vsel %vm85, %v167, %v166
    %v169 = vsub.s32 4, %v145
    %v170 = vsel %vm85, %v169, %v145
    %v171 = vsel %vm84, %v82, %v168
    %v172 = vsel %vm84, 0, %v170
    %v173 = vcosq.f32.pop %v171
    %v174 = vsinq.f32.pop %v171
    %vm175 = vweird.f32 %v82
    %v176 = vand.u32 %v172, 3
    %vm177 = vcmp.lt.s32.totalorder %v176, 2
    %vm178 = vcmp.eq.s32.totalorder %v176, 0
    %v179 = vxor.u32 %v174, 2147483648
    %v180 = vsel %vm178, %v173, %v179
    %vm181 = vcmp.eq.s32.totalorder %v176, 2
    %v182 = vxor.u32 %v173, 2147483648
    %v183 = vsel %vm181, %v182, %v174
    %v184 = vsel %vm177, %v180, %v183
    %v185 = vsel %vm175, nan, %v184
    %v186 = vpack.c.bf16 %v185, %v185
    %v187 = vand.u32 2147483647, %v82
    %vm188 = vcmp.le.f32.partialorder %v187, 0.7853982
    %vm189 = vcmp.lt.s32.totalorder %v82, 0
    %v190 = vand.u32 %v82, 2139095040
    %v191 = vshrl.u32 %v190, 23
    %v192 = vsub.s32 %v191, 127
    %v193 = vand.u32 2147483647, %v82
    %v194 = vand.u32 %v193, 8388607
    %v195 = vor.u32 %v194, 8388608
    %v196 = vsub.s32 0, %v195
    %v197 = vadd.s32 %v192, 1
    %vm198 = vcmp.gt.s32.totalorder %v197, 0
    %v199 = vsel %vm198, %v197, 0
    %v200 = vshrl.u32 %v199, 5
    %v201 = vand.u32 %v199, 31
    %v202 = vsub.s32 32, %v201
    %v203 = vshrl.u32 683565275, %v202
    %v204 = vshll.u32 683565275, %v201
    %v205 = vshrl.u32 2475754826, %v202
    %v206 = vor.u32 %v204, %v205
    %v207 = vshll.u32 2475754826, %v201
    %v208 = vshrl.u32 2131351028, %v202
    %v209 = vor.u32 %v207, %v208
    %v210 = vshll.u32 2131351028, %v201
    %v211 = vshrl.u32 2102212464, %v202
    %v212 = vor.u32 %v210, %v211
    %v213 = vshll.u32 2102212464, %v201
    %v214 = vshrl.u32 920167782, %v202
    %v215 = vor.u32 %v213, %v214
    %v216 = vshll.u32 920167782, %v201
    %v217 = vshrl.u32 1326507024, %v202
    %v218 = vor.u32 %v216, %v217
    %vm219 = vcmp.lt.s32.totalorder %v200, 1
    %vm220 = vcmp.lt.s32.totalorder %v200, 2
    %vm221 = vcmp.lt.s32.totalorder %v200, 3
    %vm222 = vcmp.lt.s32.totalorder %v200, 4
    %v223 = vsel %vm219, %v203, %v206
    %v224 = vsel %vm222, %v212, 2102212464
    %v225 = vsel %vm221, %v209, %v224
    %v226 = vsel %vm220, %v223, %v225
    %v227 = vsel %vm219, %v206, %v209
    %v228 = vsel %vm222, %v215, 920167782
    %v229 = vsel %vm221, %v212, %v228
    %v230 = vsel %vm220, %v227, %v229
    %v231 = vsel %vm219, %v209, %v212
    %v232 = vsel %vm222, %v218, 1326507024
    %v233 = vsel %vm221, %v215, %v232
    %v234 = vsel %vm220, %v231, %v233
    %v235 = vshll.u32 %v195, 8
    %v236 = vmul.u32.u64.compose %v235, %v234
    %v237 = vextract.low.u32 %v236
    %v238 = vextract.high.u32 %v236
    %v239 = vmul.u32.u64.compose %v235, %v230
    %v240 = vextract.low.u32 %v239
    %v241 = vextract.high.u32 %v239
    %v242 = vmul.u32 %v235, %v226
    %v243 = vadd.s32 %v238, %v240
    %vm244 = vc.u32 %v238, %v240
    %v245 = vadd.s32 %v241, 1
    %v246 = vsel %vm244, %v245, %v241
    %v247 = vadd.s32 %v242, %v246
    %v248 = vadd.s32 %v247, 536870912
    %v249 = vshrl.u32 %v248, 30
    %v250 = vshll.u32 %v249, 30
    %v251 = vsub.s32 %v247, %v250
    %vm252 = vcmp.lt.s32.totalorder %v251, 0
    %v253 = vsub.s32 0, %v251
    %v254 = vsel %vm252, %v253, %v251
    %v255 = vclz %v254
    %v256 = vsub.s32 %v255, 2
    %vm257 = vcmp.gt.s32.totalorder 0, %v256
    %v258 = vsel %vm257, 0, %v256
    %v259 = vsub.s32 32, %v258
    %v260 = vshll.u32 %v251, %v258
    %v261 = vshrl.u32 %v243, %v259
    %v262 = vor.u32 %v260, %v261
    %v263 = vsub.s32 4294967266, %v258
    %v264 = vadd.s32 %v263, 127
    %v265 = vshll.u32 %v264, 23
    %v266 = vor.u32 4788187, %v265
    %v267 = vand.u32 2147483647, %v266
    %v269 = vcvt.s32.f32 %v262
    %v270 = vmul.f32 %v269, %v267
    %v271 = vxor.u32 %v270, 2147483648
    %v272 = vsel %vm189, %v271, %v270
    %v273 = vsub.s32 4, %v249
    %v274 = vsel %vm189, %v273, %v249
    %v275 = vsel %vm188, %v82, %v272
    %v276 = vsel %vm188, 0, %v274
    %v277 = vcosq.f32.pop %v275
    %v278 = vsinq.f32.pop %v275
    %vm279 = vweird.f32 %v82
    %v280 = vadd.s32 %v276, 3
    %v281 = vand.u32 %v280, 3
    %vm282 = vcmp.lt.s32.totalorder %v281, 2
    %vm283 = vcmp.eq.s32.totalorder %v281, 0
    %v284 = vxor.u32 %v278, 2147483648
    %v285 = vsel %vm283, %v277, %v284
    %vm286 = vcmp.eq.s32.totalorder %v281, 2
    %v287 = vxor.u32 %v277, 2147483648
    %v288 = vsel %vm286, %v287, %v278
    %v289 = vsel %vm282, %v285, %v288
    %v290 = vsel %vm279, nan, %v289
    %v291 = vpack.c.bf16 %v290, %v290
    %v292 = vld [vmem:[#allocation2] sm:$0xf]
    %v293 = vld [vmem:[#allocation2 + $0x4] sm:$0xf]
    %v294 = vld [vmem:[#allocation2 + $0x8] sm:$0xf]
    %v295 = vld [vmem:[#allocation2 + $0xc] sm:$0xf]
    %v296 = vld [vmem:[#allocation2 + $0x10] sm:$0xf]
    %v297 = vld [vmem:[#allocation2 + $0x14] sm:$0xf]
    %v298 = vld [vmem:[#allocation2 + $0x18] sm:$0xf]
    %v299 = vld [vmem:[#allocation2 + $0x1c] sm:$0xf]
    %v300 = vld [vmem:[#allocation2 + $0x20] sm:$0xf]
    %v301 = vld [vmem:[#allocation2 + $0x24] sm:$0xf]
    %v302 = vld [vmem:[#allocation2 + $0x28] sm:$0xf]
    %v303 = vld [vmem:[#allocation2 + $0x2c] sm:$0xf]
    %v304 = vld [vmem:[#allocation2 + $0x30] sm:$0xf]
    %v305 = vld [vmem:[#allocation2 + $0x34] sm:$0xf]
    %v306 = vld [vmem:[#allocation2 + $0x38] sm:$0xf]
    %v307 = vld [vmem:[#allocation2 + $0x3c] sm:$0xf]
    %v308 = vld [vmem:[#allocation5] sm:$0xf]
    %v309 = vld [vmem:[#allocation5 + $0x4] sm:$0xf]
    %v310 = vld [vmem:[#allocation5 + $0x8] sm:$0xf]
    %v311 = vld [vmem:[#allocation5 + $0xc] sm:$0xf]
    %v312 = vld [vmem:[#allocation5 + $0x10] sm:$0xf]
    %v313 = vld [vmem:[#allocation5 + $0x14] sm:$0xf]
    %v314 = vld [vmem:[#allocation5 + $0x18] sm:$0xf]
    %v315 = vld [vmem:[#allocation5 + $0x1c] sm:$0xf]
    %v316 = vld [vmem:[#allocation5 + $0x20] sm:$0xf]
    %v317 = vld [vmem:[#allocation5 + $0x24] sm:$0xf]
    %v318 = vld [vmem:[#allocation5 + $0x28] sm:$0xf]
    %v319 = vld [vmem:[#allocation5 + $0x2c] sm:$0xf]
    %v320 = vld [vmem:[#allocation5 + $0x30] sm:$0xf]
    %v321 = vld [vmem:[#allocation5 + $0x34] sm:$0xf]
    %v322 = vld [vmem:[#allocation5 + $0x38] sm:$0xf]
    %v323 = vld [vmem:[#allocation5 + $0x3c] sm:$0xf]
    %v340 = vunpack.c.l.b16 %v308
    %v341 = vunpack.c.l.b16 %v309
    %v342 = vunpack.c.l.b16 %v310
    %v343 = vunpack.c.l.b16 %v311
    %v344 = vunpack.c.l.b16 %v312
    %v345 = vunpack.c.l.b16 %v313
    %v346 = vunpack.c.l.b16 %v314
    %v347 = vunpack.c.l.b16 %v315
    %v348 = vunpack.c.l.b16 %v316
    %v349 = vunpack.c.l.b16 %v317
    %v350 = vunpack.c.l.b16 %v318
    %v351 = vunpack.c.l.b16 %v319
    %v352 = vunpack.c.l.b16 %v320
    %v353 = vunpack.c.l.b16 %v321
    %v354 = vunpack.c.l.b16 %v322
    %v355 = vunpack.c.l.b16 %v323
    %v356 = vpack.c.b16 %v341, %v340
    %v357 = vpack.c.b16 %v343, %v342
    %v358 = vpack.c.b16 %v345, %v344
    %v359 = vpack.c.b16 %v347, %v346
    %v360 = vpack.c.b16 %v349, %v348
    %v361 = vpack.c.b16 %v351, %v350
    %v362 = vpack.c.b16 %v353, %v352
    %v363 = vpack.c.b16 %v355, %v354
    %372 = vmatprep.subr.bf16.mxu0 0
    %373 = vmatpush1.bf16.msra.mxu0 %v356
    %374 = vmatprep.subr.bf16.mxu0 0
    %375 = vmatpush1.bf16.msra.mxu0 %v357
    %376 = vmatprep.subr.bf16.mxu0 0
    %377 = vmatpush1.bf16.msra.mxu0 %v358
    %378 = vmatprep.subr.bf16.mxu0 0
    %379 = vmatpush1.bf16.msra.mxu0 %v359
    %380 = vmatprep.subr.bf16.mxu0 0
    %381 = vmatpush1.bf16.msra.mxu0 %v360
    %382 = vmatprep.subr.bf16.mxu0 0
    %383 = vmatpush1.bf16.msra.mxu0 %v361
    %384 = vmatprep.subr.bf16.mxu0 0
    %385 = vmatpush1.bf16.msra.mxu0 %v362
    %386 = vmatprep.subr.bf16.mxu0 0
    %387 = vmatpush1.bf16.msra.mxu0 %v363
    %388 = vmatprep.subr.bf16.mxu0 0
    %389 = vmatpush1.bf16.msra.mxu0 0
    %390 = vmatprep.subr.bf16.mxu0 0
    %391 = vmatpush1.bf16.msra.mxu0 0
    %392 = vmatprep.subr.bf16.mxu0 0
    %393 = vmatpush1.bf16.msra.mxu0 0
    %394 = vmatprep.subr.bf16.mxu0 0
    %395 = vmatpush1.bf16.msra.mxu0 0
    %396 = vmatprep.subr.bf16.mxu0 0
    %397 = vmatpush1.bf16.msra.mxu0 0
    %398 = vmatprep.subr.bf16.mxu0 0
    %399 = vmatpush1.bf16.msra.mxu0 0
    %400 = vmatprep.subr.bf16.mxu0 0
    %401 = vmatpush1.bf16.msra.mxu0 0
    %402 = vmatprep.subr.bf16.mxu0 0
    %403 = vmatpush1.bf16.msra.mxu0 0
    %404 = vmatprep.mubr.bf16.mxu0 0
    %405 = vmatmul.mubr.bf16.gmra.mrb[0].mxu0 %v291
    %v406 = vpop.f32.mrb[0].mxu0
    %v407 = vadd.f32 0.0, %v406
    %v408 = vpop.f32.mrb[0].mxu0
    %v409 = vpop.f32.mrb[0].mxu0
    %v410 = vpop.f32.mrb[0].mxu0
    %411 = vdwg.mxu0
    %v428 = vunpack.c.l.b16 %v292
    %v429 = vunpack.c.l.b16 %v293
    %v430 = vunpack.c.l.b16 %v294
    %v431 = vunpack.c.l.b16 %v295
    %v432 = vunpack.c.l.b16 %v296
    %v433 = vunpack.c.l.b16 %v297
    %v434 = vunpack.c.l.b16 %v298
    %v435 = vunpack.c.l.b16 %v299
    %v436 = vunpack.c.l.b16 %v300
    %v437 = vunpack.c.l.b16 %v301
    %v438 = vunpack.c.l.b16 %v302
    %v439 = vunpack.c.l.b16 %v303
    %v440 = vunpack.c.l.b16 %v304
    %v441 = vunpack.c.l.b16 %v305
    %v442 = vunpack.c.l.b16 %v306
    %v443 = vunpack.c.l.b16 %v307
    %v444 = vpack.c.b16 %v429, %v428
    %v445 = vpack.c.b16 %v431, %v430
    %v446 = vpack.c.b16 %v433, %v432
    %v447 = vpack.c.b16 %v435, %v434
    %v448 = vpack.c.b16 %v437, %v436
    %v449 = vpack.c.b16 %v439, %v438
    %v450 = vpack.c.b16 %v441, %v440
    %v451 = vpack.c.b16 %v443, %v442
    %460 = vmatprep.subr.bf16.mxu0 0
    %461 = vmatpush1.bf16.msra.mxu0 %v444
    %462 = vmatprep.subr.bf16.mxu0 0
    %463 = vmatpush1.bf16.msra.mxu0 %v445
    %464 = vmatprep.subr.bf16.mxu0 0
    %465 = vmatpush1.bf16.msra.mxu0 %v446
    %466 = vmatprep.subr.bf16.mxu0 0
    %467 = vmatpush1.bf16.msra.mxu0 %v447
    %468 = vmatprep.subr.bf16.mxu0 0
    %469 = vmatpush1.bf16.msra.mxu0 %v448
    %470 = vmatprep.subr.bf16.mxu0 0
    %471 = vmatpush1.bf16.msra.mxu0 %v449
    %472 = vmatprep.subr.bf16.mxu0 0
    %473 = vmatpush1.bf16.msra.mxu0 %v450
    %474 = vmatprep.subr.bf16.mxu0 0
    %475 = vmatpush1.bf16.msra.mxu0 %v451
    %476 = vmatprep.subr.bf16.mxu0 0
    %477 = vmatpush1.bf16.msra.mxu0 0
    %478 = vmatprep.subr.bf16.mxu0 0
    %479 = vmatpush1.bf16.msra.mxu0 0
    %480 = vmatprep.subr.bf16.mxu0 0
    %481 = vmatpush1.bf16.msra.mxu0 0
    %482 = vmatprep.subr.bf16.mxu0 0
    %483 = vmatpush1.bf16.msra.mxu0 0
    %484 = vmatprep.subr.bf16.mxu0 0
    %485 = vmatpush1.bf16.msra.mxu0 0
    %486 = vmatprep.subr.bf16.mxu0 0
    %487 = vmatpush1.bf16.msra.mxu0 0
    %488 = vmatprep.subr.bf16.mxu0 0
    %489 = vmatpush1.bf16.msra.mxu0 0
    %490 = vmatprep.subr.bf16.mxu0 0
    %491 = vmatpush1.bf16.msra.mxu0 0
    %492 = vmatprep.mubr.bf16.mxu0 0
    %493 = vmatmul.mubr.bf16.gmra.mrb[0].mxu0 %v186
    %v494 = vpop.f32.mrb[0].mxu0
    %v495 = vadd.f32 %v407, %v494
    %v496 = vpop.f32.mrb[0].mxu0
    %v497 = vpop.f32.mrb[0].mxu0
    %v498 = vpop.f32.mrb[0].mxu0
    %499 = vdwg.mxu0
    %v500 = vld [vmem:[%s4] sm:$0x1]
    %v502 = vlaneseq
    %v503 = vshrl.u32 %v502, 7
    %v504 = vsub.s32 0, %v503
    %v505 = vrot.slane %v500, %v504
    %v507 = vadd.f32 %v495, %v505
    %v508 = vxor.u32 %v507, 2147483648
    %v509 = vmul.f32 %v508, 1.442695
    %v510 = vpow.pop %v509
    %v511 = vadd.f32 %v510, 1.0
    %v512 = vrcp.pop %v511
    %v513 = vmul.f32 1.0, %v512
    %v514 = vmul.f32 %v507, %v513
    %v515 = vpack.c.bf16 %v514, %v514
    %v516 = vld [vmem:[#allocation7] sm:$0xf]
    %v517 = vld [vmem:[#allocation7 + $0x4] sm:$0xf]
    %v518 = vld [vmem:[#allocation7 + $0x8] sm:$0xf]
    %v519 = vld [vmem:[#allocation7 + $0xc] sm:$0xf]
    %v520 = vld [vmem:[#allocation7 + $0x10] sm:$0xf]
    %v521 = vld [vmem:[#allocation7 + $0x14] sm:$0xf]
    %v522 = vld [vmem:[#allocation7 + $0x18] sm:$0xf]
    %v523 = vld [vmem:[#allocation7 + $0x1c] sm:$0xf]
    %v524 = vld [vmem:[#allocation7 + $0x20] sm:$0xf]
    %v525 = vld [vmem:[#allocation7 + $0x24] sm:$0xf]
    %v526 = vld [vmem:[#allocation7 + $0x28] sm:$0xf]
    %v527 = vld [vmem:[#allocation7 + $0x2c] sm:$0xf]
    %v528 = vld [vmem:[#allocation7 + $0x30] sm:$0xf]
    %v529 = vld [vmem:[#allocation7 + $0x34] sm:$0xf]
    %v530 = vld [vmem:[#allocation7 + $0x38] sm:$0xf]
    %v531 = vld [vmem:[#allocation7 + $0x3c] sm:$0xf]
    %v532 = vld [vmem:[%s6] sm:$0x1]
    %v534 = vlaneseq
    %v535 = vshrl.u32 %v534, 7
    %v536 = vsub.s32 0, %v535
    %v537 = vrot.slane %v532, %v536
    %v555 = vunpack.c.l.b16 %v516
    %v556 = vunpack.c.l.b16 %v517
    %v557 = vunpack.c.l.b16 %v518
    %v558 = vunpack.c.l.b16 %v519
    %v559 = vunpack.c.l.b16 %v520
    %v560 = vunpack.c.l.b16 %v521
    %v561 = vunpack.c.l.b16 %v522
    %v562 = vunpack.c.l.b16 %v523
    %v563 = vunpack.c.l.b16 %v524
    %v564 = vunpack.c.l.b16 %v525
    %v565 = vunpack.c.l.b16 %v526
    %v566 = vunpack.c.l.b16 %v527
    %v567 = vunpack.c.l.b16 %v528
    %v568 = vunpack.c.l.b16 %v529
    %v569 = vunpack.c.l.b16 %v530
    %v570 = vunpack.c.l.b16 %v531
    %v571 = vpack.c.b16 %v556, %v555
    %v572 = vpack.c.b16 %v558, %v557
    %v573 = vpack.c.b16 %v560, %v559
    %v574 = vpack.c.b16 %v562, %v561
    %v575 = vpack.c.b16 %v564, %v563
    %v576 = vpack.c.b16 %v566, %v565
    %v577 = vpack.c.b16 %v568, %v567
    %v578 = vpack.c.b16 %v570, %v569
    %587 = vmatprep.subr.bf16.mxu0 0
    %588 = vmatpush1.bf16.msra.mxu0 %v571
    %589 = vmatprep.subr.bf16.mxu0 0
    %590 = vmatpush1.bf16.msra.mxu0 %v572
    %591 = vmatprep.subr.bf16.mxu0 0
    %592 = vmatpush1.bf16.msra.mxu0 %v573
    %593 = vmatprep.subr.bf16.mxu0 0
    %594 = vmatpush1.bf16.msra.mxu0 %v574
    %595 = vmatprep.subr.bf16.mxu0 0
    %596 = vmatpush1.bf16.msra.mxu0 %v575
    %597 = vmatprep.subr.bf16.mxu0 0
    %598 = vmatpush1.bf16.msra.mxu0 %v576
    %599 = vmatprep.subr.bf16.mxu0 0
    %600 = vmatpush1.bf16.msra.mxu0 %v577
    %601 = vmatprep.subr.bf16.mxu0 0
    %602 = vmatpush1.bf16.msra.mxu0 %v578
    %603 = vmatprep.subr.bf16.mxu0 0
    %604 = vmatpush1.bf16.msra.mxu0 0
    %605 = vmatprep.subr.bf16.mxu0 0
    %606 = vmatpush1.bf16.msra.mxu0 0
    %607 = vmatprep.subr.bf16.mxu0 0
    %608 = vmatpush1.bf16.msra.mxu0 0
    %609 = vmatprep.subr.bf16.mxu0 0
    %610 = vmatpush1.bf16.msra.mxu0 0
    %611 = vmatprep.subr.bf16.mxu0 0
    %612 = vmatpush1.bf16.msra.mxu0 0
    %613 = vmatprep.subr.bf16.mxu0 0
    %614 = vmatpush1.bf16.msra.mxu0 0
    %615 = vmatprep.subr.bf16.mxu0 0
    %616 = vmatpush1.bf16.msra.mxu0 0
    %617 = vmatprep.subr.bf16.mxu0 0
    %618 = vmatpush1.bf16.msra.mxu0 0
    %619 = vmatprep.mubr.bf16.mxu0 0
    %620 = vmatmul.mubr.bf16.gmra.mrb[0].mxu0 %v515
    %v621 = vpop.f32.mrb[0].mxu0
    %v622 = vadd.f32 %v537, %v621
    %v623 = vpop.f32.mrb[0].mxu0
    %v624 = vpop.f32.mrb[0].mxu0
    %v625 = vpop.f32.mrb[0].mxu0
    %626 = vdwg.mxu0
    %627 = vst [vmem:[#allocation8] sm:$0xff] %v622
    // Predicated region
    $region42: #{tpu_custom_call.1} parent=1 // pred_check
      _
    $region43: #{tpu_custom_call.1} parent=1 // pred_check_branch
      %629 = sbr.rel (0) target = $region45
    $region44: #{tpu_custom_call.1} parent=1 // pred_region
      %s631 = ssub.s32 128, 128
      %632 = vsyncadd [#allocation4], %s631
      %s634 = sshll.u32 [#allocation8], 4
      %s635 = int_to_ptr.vmem [resolvable:$true] %s634
      %637 = dma.vmem_to_hbm [thread:$0]  %s635, 128, %s7, [#allocation4]
    $region45: #{tpu_custom_call.1} parent=1 // pred_fallthru
      _
    // Predicated region
    $region46: #{tpu_custom_call.1} parent=1 // pred_check
      _
    $region47: #{tpu_custom_call.1} parent=1 // pred_check_branch
      %639 = sbr.rel (0) target = $region49
    $region48: #{tpu_custom_call.1} parent=1 // pred_region
      %640 = dma.done [#allocation4], 128
    $region49: #{tpu_custom_call.1} parent=1 // pred_fallthru
      _
    %641 = vsyncpa [#allocation3], 1
    %642 = vsyncpa [#allocation6], 1
    %643 = vsyncpa [#allocation4], 1

</llo_original>
